<compile_context>
chip_gen: v6e
topology: v6e:2x2x1
jax: 0.10.0
libtpu: 0.0.40
codegen_flags: <defaults>
</compile_context>

<pallas_src>
import functools
import numpy as np
import jax
import jax.numpy as jnp
from jax.experimental import pallas as pl
from jax.experimental.pallas import tpu as pltpu

PRIMITIVES = [
    'none', 'max_pool_3x3', 'avg_pool_3x3', 'skip_connect',
    'sep_conv_3x3', 'sep_conv_5x5', 'dil_conv_3x3', 'dil_conv_5x5',
]


def _round_up(x, m):
    return ((x + m - 1) // m) * m


# ================================ MXU matmul ================================

def _matmul_kernel(a_ref, b_ref, o_ref, acc_ref):
    @pl.when(pl.program_id(2) == 0)
    def _():
        acc_ref[...] = jnp.zeros_like(acc_ref)
    acc_ref[...] += jnp.dot(a_ref[...], b_ref[...],
                            preferred_element_type=jnp.float32)

    @pl.when(pl.program_id(2) == pl.num_programs(2) - 1)
    def _():
        o_ref[...] = acc_ref[...]


def _matmul_bias_kernel(a_ref, b_ref, bias_ref, o_ref, acc_ref):
    @pl.when(pl.program_id(2) == 0)
    def _():
        acc_ref[...] = jnp.zeros_like(acc_ref)
    acc_ref[...] += jnp.dot(a_ref[...], b_ref[...],
                            preferred_element_type=jnp.float32)

    @pl.when(pl.program_id(2) == pl.num_programs(2) - 1)
    def _():
        o_ref[...] = acc_ref[...] + bias_ref[...]


def pallas_matmul(a, b, bias=None):
    """(M, K) @ (K, N) [+ bias]  ->  (M, N) float32.

    bf16 MXU inputs with f32 accumulation in a VMEM scratch, lane-dense
    (128-padded) output tiles, reduction axis on the grid ('arbitrary')."""
    M, K = a.shape
    K2, N = b.shape
    assert K == K2
    a = a.astype(jnp.bfloat16)
    b = b.astype(jnp.bfloat16)

    TM = 128 if M >= 128 else _round_up(M, 8)
    TN = 128
    TK = K if K <= 1024 else 512
    Mp, Np, Kp = _round_up(M, TM), _round_up(N, TN), _round_up(K, TK)
    if (Mp, Kp) != (M, K):
        a = jnp.pad(a, ((0, Mp - M), (0, Kp - K)))
    if (Kp, Np) != (K, N):
        b = jnp.pad(b, ((0, Kp - K), (0, Np - N)))

    in_specs = [pl.BlockSpec((TM, TK), lambda i, j, k: (i, k)),
                pl.BlockSpec((TK, TN), lambda i, j, k: (k, j))]
    args = [a, b]
    if bias is not None:
        bias_p = jnp.pad(bias.astype(jnp.float32).reshape(1, N),
                         ((0, 0), (0, Np - N)))
        in_specs.append(pl.BlockSpec((1, TN), lambda i, j, k: (0, j)))
        args.append(bias_p)
        kernel = _matmul_bias_kernel
    else:
        kernel = _matmul_kernel

    out = pl.pallas_call(
        kernel,
        out_shape=jax.ShapeDtypeStruct((Mp, Np), jnp.float32),
        grid=(Mp // TM, Np // TN, Kp // TK),
        in_specs=in_specs,
        out_specs=pl.BlockSpec((TM, TN), lambda i, j, k: (i, j)),
        scratch_shapes=[pltpu.VMEM((TM, TN), jnp.float32)],
        compiler_params=pltpu.CompilerParams(
            dimension_semantics=("parallel", "parallel", "arbitrary"),
            vmem_limit_bytes=32 * 1024 * 1024),
    )(*args)
    return out[:M, :N]


# ===================== VPU shifted-MAC kernels (dw conv / pool) =============

def _dwconv_kernel(taps, x_ref, w_ref, o_ref):
    # x_ref: (1, Hp, Wp, C)   w_ref: (kh*kw, C)   o_ref: (1, oh, ow, C)
    oh, ow = o_ref.shape[1], o_ref.shape[2]
    acc = None
    for t, (di, dj) in enumerate(taps):
        patch = x_ref[:, di:di + oh, dj:dj + ow, :]
        term = patch * w_ref[t, :]          # per-channel weight, lane broadcast
        acc = term if acc is None else acc + term
    o_ref[...] = acc


def _maxpool_kernel(taps, x_ref, o_ref):
    oh, ow = o_ref.shape[1], o_ref.shape[2]
    acc = None
    for (di, dj) in taps:
        patch = x_ref[:, di:di + oh, dj:dj + ow, :]
        acc = patch if acc is None else jnp.maximum(acc, patch)
    o_ref[...] = acc


def _avgpool_kernel(taps, x_ref, inv_ref, o_ref):
    oh, ow = o_ref.shape[1], o_ref.shape[2]
    acc = None
    for (di, dj) in taps:
        patch = x_ref[:, di:di + oh, dj:dj + ow, :]
        acc = patch if acc is None else acc + patch
    o_ref[...] = acc * inv_ref[...]         # count_include_pad=False


def _shifted_call(kernel, inputs, in_specs, N, oh, ow, C):
    return pl.pallas_call(
        kernel,
        out_shape=jax.ShapeDtypeStruct((N, oh, ow, C), jnp.float32),
        grid=(N,),
        in_specs=in_specs,
        out_specs=pl.BlockSpec((1, oh, ow, C), lambda n: (n, 0, 0, 0)),
        compiler_params=pltpu.CompilerParams(dimension_semantics=("parallel",)),
    )(*inputs)


def depthwise_conv(x, w, stride, padding, dilation=1):
    """groups=C depthwise conv, NHWC.  w: (kh*kw, C).

    Stride is handled by computing the stride-1 output and subsampling
    (stride is only ever 1 or 2); the kernel itself only does contiguous
    static window loads + shifted MACs on the VPU."""
    N, H, W, C = x.shape
    KK = w.shape[0]
    k = int(round(KK ** 0.5))
    xp = jnp.pad(x.astype(jnp.float32),
                 ((0, 0), (padding, padding), (padding, padding), (0, 0)))
    Hp, Wp = H + 2 * padding, W + 2 * padding
    oh, ow = Hp - dilation * (k - 1), Wp - dilation * (k - 1)
    taps = [(i * dilation, j * dilation) for i in range(k) for j in range(k)]
    out = _shifted_call(
        functools.partial(_dwconv_kernel, taps),
        [xp, w.astype(jnp.float32)],
        [pl.BlockSpec((1, Hp, Wp, C), lambda n: (n, 0, 0, 0)),
         pl.BlockSpec((KK, C), lambda n: (0, 0))],
        N, oh, ow, C)
    if stride > 1:
        out = out[:, ::stride, ::stride, :]
    return out


def pool2d(x, k, stride, padding, mode):
    """3x3 max / avg pooling, NHWC (avg: count_include_pad=False)."""
    N, H, W, C = x.shape
    Hp, Wp = H + 2 * padding, W + 2 * padding
    oh, ow = Hp - (k - 1), Wp - (k - 1)
    taps = [(i, j) for i in range(k) for j in range(k)]
    if mode == 'max':
        xp = jnp.pad(x.astype(jnp.float32),
                     ((0, 0), (padding, padding), (padding, padding), (0, 0)),
                     constant_values=-jnp.inf)
        out = _shifted_call(
            functools.partial(_maxpool_kernel, taps), [xp],
            [pl.BlockSpec((1, Hp, Wp, C), lambda n: (n, 0, 0, 0))],
            N, oh, ow, C)
    else:
        xp = jnp.pad(x.astype(jnp.float32),
                     ((0, 0), (padding, padding), (padding, padding), (0, 0)))
        ones = np.pad(np.ones((H, W), np.float32), padding)
        counts = np.zeros((oh, ow), np.float32)
        for (di, dj) in taps:
            counts += ones[di:di + oh, dj:dj + ow]
        inv = jnp.asarray(1.0 / counts, jnp.float32).reshape(1, oh, ow, 1)
        out = _shifted_call(
            functools.partial(_avgpool_kernel, taps), [xp, inv],
            [pl.BlockSpec((1, Hp, Wp, C), lambda n: (n, 0, 0, 0)),
             pl.BlockSpec((1, oh, ow, 1), lambda n: (0, 0, 0, 0))],
            N, oh, ow, C)
    if stride > 1:
        out = out[:, ::stride, ::stride, :]
    return out


# ========================= MixedOp / node weighted sum ======================

def _wsum_kernel(n_in, w_ref, *refs):
    x_refs, o_ref = refs[:n_in], refs[n_in]
    acc = w_ref[0] * x_refs[0][...]
    for k in range(1, n_in):
        acc = acc + w_ref[k] * x_refs[k][...]
    o_ref[...] = acc


def pallas_weighted_sum(xs, ws):
    """sum_k ws[k] * xs[k]   (all xs same shape; ws are traced scalars).

    Operands are presented lane-dense as (rows, 128) tiles and accumulated
    per-k on the VPU; the scalar weights sit in SMEM (no (num_ops, L) stack
    materialized in HBM)."""
    shape = xs[0].shape
    L = int(np.prod(shape))
    LANE = 128
    rows = _round_up(L, LANE) // LANE
    TB = 256 if rows >= 256 else _round_up(rows, 8)
    rows_p = _round_up(rows, TB)
    Lp = rows_p * LANE
    flat = [jnp.pad(x.astype(jnp.float32).reshape(-1),
                    (0, Lp - L)).reshape(rows_p, LANE) for x in xs]
    w_arr = jnp.stack(list(ws)).astype(jnp.float32)
    n_in = len(xs)
    out = pl.pallas_call(
        functools.partial(_wsum_kernel, n_in),
        out_shape=jax.ShapeDtypeStruct((rows_p, LANE), jnp.float32),
        grid=(rows_p // TB,),
        in_specs=[pl.BlockSpec(memory_space=pltpu.MemorySpace.SMEM)]
                 + [pl.BlockSpec((TB, LANE), lambda i: (i, 0))] * n_in,
        out_specs=pl.BlockSpec((TB, LANE), lambda i: (i, 0)),
        compiler_params=pltpu.CompilerParams(dimension_semantics=("parallel",)),
    )(w_arr, *flat)
    return out.reshape(-1)[:L].reshape(shape)


# ============================ global average pool ===========================

def _gap_kernel(x_ref, o_ref):
    o_ref[...] = jnp.mean(x_ref[...], axis=1, keepdims=True)


def pallas_global_avg_pool(x):
    """AdaptiveAvgPool2d(1): (N, H, W, C) -> (N, C)."""
    N, H, W, C = x.shape
    x2 = x.reshape(N, H * W, C).astype(jnp.float32)
    out = pl.pallas_call(
        _gap_kernel,
        out_shape=jax.ShapeDtypeStruct((N, 1, C), jnp.float32),
        in_specs=[pl.BlockSpec(memory_space=pltpu.MemorySpace.VMEM)],
        out_specs=pl.BlockSpec(memory_space=pltpu.MemorySpace.VMEM),
    )(x2)
    return out.reshape(N, C)


# ============================== conv / BN glue ==============================

def relu(x):
    return jnp.maximum(x, 0.0)


def batch_norm(x, gamma=None, beta=None, eps=1e-5):
    # Training-mode BatchNorm2d (biased variance), NHWC, stats in f32.
    mean = jnp.mean(x, axis=(0, 1, 2), keepdims=True)
    var = jnp.var(x, axis=(0, 1, 2), keepdims=True)
    y = (x - mean) * jax.lax.rsqrt(var + eps)
    if gamma is not None:
        y = y * gamma.reshape(1, 1, 1, -1) + beta.reshape(1, 1, 1, -1)
    return y


def conv1x1(x, wmat):
    """1x1 conv (stride 1), NHWC: reshape + MXU matmul."""
    N, H, W, Cin = x.shape
    out = pallas_matmul(x.reshape(N * H * W, Cin), wmat)
    return out.reshape(N, H, W, wmat.shape[1])


def conv_kxk_dense(x, wmat, k, stride, padding):
    """Dense kxk conv (stem only) via im2col + MXU matmul.
    wmat: (k*k*Cin, Cout), column order (kh, kw, Cin)."""
    N, H, W, Cin = x.shape
    xp = jnp.pad(x, ((0, 0), (padding, padding), (padding, padding), (0, 0)))
    oh = (H + 2 * padding - k) // stride + 1
    ow = (W + 2 * padding - k) // stride + 1
    pats = []
    for i in range(k):
        for j in range(k):
            pats.append(xp[:, i:i + (oh - 1) * stride + 1:stride,
                           j:j + (ow - 1) * stride + 1:stride, :])
    col = jnp.stack(pats, axis=3).reshape(N * oh * ow, k * k * Cin)
    out = pallas_matmul(col, wmat)
    return out.reshape(N, oh, ow, wmat.shape[1])


# ============================== op forward fns ==============================

def apply_fr(p, x):
    """FactorizedReduce (affine=False)."""
    y = relu(x)
    a = conv1x1(y[:, ::2, ::2, :], p['c1'])
    b = conv1x1(y[:, 1::2, 1::2, :], p['c2'])
    return batch_norm(jnp.concatenate([a, b], axis=-1))


def apply_binconv(p, x):
    # TODO(synk): exact BDARTS BinaryConv binarization (sign/STE) source not
    # provided; approximated with a float 1x1 conv + BatchNorm(affine=False).
    return batch_norm(conv1x1(x, p['w']))


def apply_sep(p, x, stride, pad):
    y = relu(x)
    y = depthwise_conv(y, p['dw1'], stride=stride, padding=pad)
    y = batch_norm(conv1x1(y, p['pw1']))
    y = relu(y)
    y = depthwise_conv(y, p['dw2'], stride=1, padding=pad)
    return batch_norm(conv1x1(y, p['pw2']))


def apply_dil(p, x, stride, pad):
    y = relu(x)
    y = depthwise_conv(y, p['dw'], stride=stride, padding=pad, dilation=2)
    return batch_norm(conv1x1(y, p['pw']))


def apply_primitive(prim, p, x, stride):
    if prim == 'max_pool_3x3':
        return batch_norm(pool2d(x, 3, stride, 1, 'max'))   # pool + BN(affine=False)
    if prim == 'avg_pool_3x3':
        return batch_norm(pool2d(x, 3, stride, 1, 'avg'))
    if prim == 'skip_connect':
        # TODO(synk): dropout branch on Identity for p>0 not implemented (p=0.0).
        return x if stride == 1 else apply_fr(p, x)
    if prim == 'sep_conv_3x3':
        return apply_sep(p, x, stride, 1)
    if prim == 'sep_conv_5x5':
        return apply_sep(p, x, stride, 2)
    if prim == 'dil_conv_3x3':
        return apply_dil(p, x, stride, 2)
    if prim == 'dil_conv_5x5':
        return apply_dil(p, x, stride, 4)
    raise ValueError(prim)


# ============================ parameter init ================================

class KeyGen:
    def __init__(self, key):
        self.key = key

    def next(self):
        self.key, sub = jax.random.split(self.key)
        return sub


def mat_w(kg, c_in, c_out):
    return (jax.random.normal(kg.next(), (c_in, c_out), jnp.float32)
            * (2.0 / c_in) ** 0.5)


def dw_w(kg, C, k):
    return (jax.random.normal(kg.next(), (k * k, C), jnp.float32)
            * (2.0 / (k * k)) ** 0.5)


def init_sep(kg, C, k):
    return {'dw1': dw_w(kg, C, k), 'pw1': mat_w(kg, C, C),
            'dw2': dw_w(kg, C, k), 'pw2': mat_w(kg, C, C)}


def init_dil(kg, C, k):
    return {'dw': dw_w(kg, C, k), 'pw': mat_w(kg, C, C)}


def init_fr(kg, C_in, C_out):
    return {'c1': mat_w(kg, C_in, C_out // 2),
            'c2': mat_w(kg, C_in, C_out - C_out // 2)}


def init_mixed_op(kg, C, stride):
    ops = []
    for prim in PRIMITIVES:
        if prim == 'sep_conv_3x3':
            p = init_sep(kg, C, 3)
        elif prim == 'sep_conv_5x5':
            p = init_sep(kg, C, 5)
        elif prim == 'dil_conv_3x3':
            p = init_dil(kg, C, 3)
        elif prim == 'dil_conv_5x5':
            p = init_dil(kg, C, 5)
        elif prim == 'skip_connect' and stride != 1:
            p = init_fr(kg, C, C)
        else:
            p = None
        ops.append((prim, p))
    return ops


def init_cell(kg, steps, multiplier, C_pp, C_p, C, reduction, reduction_prev):
    cell = {'reduction': reduction, 'steps': steps, 'multiplier': multiplier, 'C': C}
    if reduction_prev:
        cell['pre0'] = ('fr', init_fr(kg, C_pp, C))
    else:
        cell['pre0'] = ('bc', {'w': mat_w(kg, C_pp, C)})
    cell['pre1'] = {'w': mat_w(kg, C_p, C)}
    ops, strides = [], []
    for i in range(steps):
        for j in range(2 + i):
            stride = 2 if reduction and j < 2 else 1
            ops.append(init_mixed_op(kg, C, stride))
            strides.append(stride)
    cell['ops'] = ops
    cell['strides'] = strides
    return cell


def apply_cell(cell, s0, s1, weights):
    kind, p0 = cell['pre0']
    s0 = apply_fr(p0, s0) if kind == 'fr' else apply_binconv(p0, s0)
    s1 = apply_binconv(cell['pre1'], s1)
    states = [s0, s1]
    offset = 0
    for _ in range(cell['steps']):
        ys, ws = [], []
        for j, h in enumerate(states):
            w_row = weights[offset + j]
            stride = cell['strides'][offset + j]
            for idx, (prim, p) in enumerate(cell['ops'][offset + j]):
                if prim == 'none':            # contributes exactly zero -> skip
                    continue
                ys.append(apply_primitive(prim, p, h, stride))
                ws.append(w_row[idx])
        s = pallas_weighted_sum(ys, ws)       # fused MixedOp + edge sum per node
        offset += len(states)
        states.append(s)
    return jnp.concatenate(states[-cell['multiplier']:], axis=-1)


def init_network(key, C, num_classes, layers, steps, multiplier, stem_multiplier):
    kg = KeyGen(key)
    net = {}
    C_curr = stem_multiplier * C
    net['stem_w'] = mat_w(kg, 3 * 3 * 3, C_curr)     # dense im2col layout (kh,kw,Cin)
    net['stem_gamma'] = jnp.ones((C_curr,), jnp.float32)
    net['stem_beta'] = jnp.zeros((C_curr,), jnp.float32)
    C_pp, C_p, C_curr = C_curr, C_curr, C
    cells = []
    reduction_prev = False
    for i in range(layers):
        if i in [layers // 3, 2 * layers // 3]:
            C_curr *= 2
            reduction = True
        else:
            reduction = False
        cell = init_cell(kg, steps, multiplier, C_pp, C_p, C_curr,
                         reduction, reduction_prev)
        reduction_prev = reduction
        cells.append(cell)
        C_pp, C_p = C_p, multiplier * C_curr
    net['cells'] = cells
    net['cls_w'] = jax.random.normal(kg.next(), (C_p, num_classes), jnp.float32) * 0.01
    net['cls_b'] = jnp.zeros((num_classes,), jnp.float32)
    k = sum(1 for i in range(steps) for _ in range(2 + i))
    num_ops = len(PRIMITIVES)
    net['alphas_normal'] = 0.001 * jax.random.normal(kg.next(), (k, num_ops), jnp.float32)
    net['alphas_reduce'] = 0.001 * jax.random.normal(kg.next(), (k, num_ops), jnp.float32)
    return net


def network_forward(net, x_nchw):
    x = jnp.transpose(x_nchw, (0, 2, 3, 1))            # NCHW -> NHWC (internal)
    # stem: Conv2d(3, 3*C, 3, pad=1, bias=False) + BatchNorm2d(affine=True)
    s = conv_kxk_dense(x, net['stem_w'], 3, 1, 1)
    s = batch_norm(s, net['stem_gamma'], net['stem_beta'])
    s0 = s1 = s
    for cell in net['cells']:
        alphas = net['alphas_reduce'] if cell['reduction'] else net['alphas_normal']
        weights = jax.nn.softmax(alphas, axis=-1)
        s0, s1 = s1, apply_cell(cell, s0, s1, weights)
    pooled = pallas_global_avg_pool(s1)                 # AdaptiveAvgPool2d(1)
    # classifier: Linear(C_prev, num_classes) with fused bias epilogue
    logits = pallas_matmul(pooled, net['cls_w'], bias=net['cls_b'])
    return logits


# ================================== main ====================================

if __name__ == "__main__":
    # Small configuration consistent with the module's constructor:
    # C=4, num_classes=10, layers=2, steps=2, multiplier=2, stem_multiplier=3,
    # group=1, p=0.0 (no dropout).  Input: CIFAR-like NCHW (2, 3, 16, 16).
    C, num_classes, layers = 4, 10, 2
    steps, multiplier, stem_multiplier = 2, 2, 3

    net = init_network(jax.random.PRNGKey(1), C, num_classes, layers,
                       steps, multiplier, stem_multiplier)

    x = jax.random.normal(jax.random.PRNGKey(0), (2, 3, 16, 16), jnp.float32)

    logits = network_forward(net, x)
    logits = jax.block_until_ready(logits)
    assert logits.shape == (2, num_classes)
    assert bool(jnp.all(jnp.isfinite(logits)))
    print("KERNEL_OK")
</pallas_src>

<mosaic_0001>
module attributes {stable_mosaic.version = 11 : i64} {
  func.func @_matmul_kernel(%arg0: i32, %arg1: i32, %arg2: i32, %arg3: memref<128x27xbf16, #tpu.memory_space<vmem>>, %arg4: memref<27x128xbf16, #tpu.memory_space<vmem>>, %arg5: memref<128x128xf32, #tpu.memory_space<vmem>>, %arg6: memref<128x128xf32, #tpu.memory_space<vmem>>) attributes {dimension_semantics = [#tpu.dimension_semantics<parallel>, #tpu.dimension_semantics<parallel>, #tpu.dimension_semantics<arbitrary>], iteration_bounds = array<i64: 4, 1, 1>, scalar_prefetch = 0 : i64, scratch_operands = 1 : i64, tpu.core_type = #tpu.core_type<tc>, window_params = [{transform_indices = @transform_0, window_bounds = array<i64: 128, 27>}, {transform_indices = @transform_1, window_bounds = array<i64: 27, 128>}, {transform_indices = @transform_2, window_bounds = array<i64: 128, 128>}]} {
    %c0_i32 = arith.constant 0 : i32
    %0 = arith.cmpi eq, %arg2, %c0_i32 : i32
    %1 = arith.extui %0 : i1 to i32
    %c0_i32_0 = arith.constant 0 : i32
    %2 = arith.cmpi ne, %1, %c0_i32_0 : i32
    scf.if %2 {
      %cst_10 = arith.constant 0.000000e+00 : f32
      %12 = vector.broadcast %cst_10 : f32 to vector<128x128xf32>
      %c0_11 = arith.constant 0 : index
      %c0_12 = arith.constant 0 : index
      %13 = vector.load %arg6[%c0_11, %c0_12] : memref<128x128xf32, #tpu.memory_space<vmem>>, vector<128x128xf32>
      tpu.vector_store %arg6[%c0_11, %c0_12], %12 {strides = array<i32>} : memref<128x128xf32, #tpu.memory_space<vmem>>, vector<128x128xf32>,
    } else {
    }
    %c0 = arith.constant 0 : index
    %c0_1 = arith.constant 0 : index
    %3 = vector.load %arg6[%c0, %c0_1] : memref<128x128xf32, #tpu.memory_space<vmem>>, vector<128x128xf32>
    %c0_2 = arith.constant 0 : index
    %c0_3 = arith.constant 0 : index
    %4 = vector.load %arg3[%c0_2, %c0_3] : memref<128x27xbf16, #tpu.memory_space<vmem>>, vector<128x27xbf16>
    %c0_4 = arith.constant 0 : index
    %c0_5 = arith.constant 0 : index
    %5 = vector.load %arg4[%c0_4, %c0_5] : memref<27x128xbf16, #tpu.memory_space<vmem>>, vector<27x128xbf16>
    %cst = arith.constant dense<0.000000e+00> : vector<128x128xf32>
    %6 = tpu.matmul %4, %5, %cst {dimension_numbers = #tpu.dot_dimension_numbers<[1], [0], [0], [1], [0, 0, 1, 1], [], []>} : vector<128x27xbf16>, vector<27x128xbf16>, vector<128x128xf32> -> vector<128x128xf32>
    %7 = arith.addf %3, %6 : vector<128x128xf32>
    %c0_6 = arith.constant 0 : index
    %c0_7 = arith.constant 0 : index
    %8 = vector.load %arg6[%c0_6, %c0_7] : memref<128x128xf32, #tpu.memory_space<vmem>>, vector<128x128xf32>
    tpu.vector_store %arg6[%c0_6, %c0_7], %7 {strides = array<i32>} : memref<128x128xf32, #tpu.memory_space<vmem>>, vector<128x128xf32>,
    %c0_i32_8 = arith.constant 0 : i32
    %9 = arith.cmpi eq, %arg2, %c0_i32_8 : i32
    %10 = arith.extui %9 : i1 to i32
    %c0_i32_9 = arith.constant 0 : i32
    %11 = arith.cmpi ne, %10, %c0_i32_9 : i32
    scf.if %11 {
      %c0_10 = arith.constant 0 : index
      %c0_11 = arith.constant 0 : index
      %12 = vector.load %arg6[%c0_10, %c0_11] : memref<128x128xf32, #tpu.memory_space<vmem>>, vector<128x128xf32>
      %c0_12 = arith.constant 0 : index
      %c0_13 = arith.constant 0 : index
      %13 = vector.load %arg5[%c0_12, %c0_13] : memref<128x128xf32, #tpu.memory_space<vmem>>, vector<128x128xf32>
      tpu.vector_store %arg5[%c0_12, %c0_13], %12 {strides = array<i32>} : memref<128x128xf32, #tpu.memory_space<vmem>>, vector<128x128xf32>,
    } else {
    }
    return
  }
  func.func @transform_0(%arg0: i32, %arg1: i32, %arg2: i32) -> (i32, i32) {
    %c0_i32 = arith.constant 0 : i32
    return %arg0, %arg2 : i32, i32
  }
  func.func @transform_1(%arg0: i32, %arg1: i32, %arg2: i32) -> (i32, i32) {
    %c0_i32 = arith.constant 0 : i32
    return %arg2, %arg1 : i32, i32
  }
  func.func @transform_2(%arg0: i32, %arg1: i32, %arg2: i32) -> (i32, i32) {
    %c0_i32 = arith.constant 0 : i32
    return %arg0, %arg1 : i32, i32
  }
}

</mosaic_0001>

<llo_original>
// kernel: tpu_custom_call.1
$region0: #{tpu_custom_call.1}
  #allocation0 [shape = 'u32[]', space=smem, size = 0x4, offset = 0x4, fixed_abs, tag = 'smem constant byte address 0x4 - core index']
  #allocation1 [shape = 'u32[144,128]{1,0:T(1,128)}', space=vmem, size = 0x12000, scoped, tag = 'internal scratch']
  #allocation2 [shape = 'f32[128,128]{1,0:T(8,128)}', space=vmem, size = 0x10000, scoped, tag = 'scratch operand']
  %s0 = inlined_call_operand.vmem [shape: bf16[512,27], index: 0, kind: input, shape index: {}]
  %s1 = inlined_call_operand.vmem [shape: bf16[27,128], index: 1, kind: input, shape index: {}]
  %s2 = inlined_call_operand.hbm [shape: f32[512,128], index: 2, kind: output, shape index: {}]
  %s3 = sld [smem:[#allocation0]]
  $region49: #{tpu_custom_call.1} parent=0
    _
  %s5 = ssub.s32 1, %s3
  %s6 = scalar_select 0, %s5, %s3
  $region1: #{tpu_custom_call.1} parent=0
    #allocation3 [shape = 'u8[131072]{0}', space=vmem, size = 0x20000, scoped, tag = 'output window, operand 0']
    #allocation4 [shape = 's32[2]{0}', space=sflag, size = 0x8, scoped, tag = 'scoped memory for tpu_custom_call.1']
    %7 = vsyncpa [#allocation4], 0
    %s8 = scalar_lea.sflag [#allocation4], 1
    %9 = vsyncpa %s8, 0
    loop: start=0, step=1, limit=6
    $region2: #{tpu_custom_call.1} parent=1 // loop_pre_header
      _
    $region3: #{tpu_custom_call.1} parent=1 // loop_header
      %s11 = sphi 0, %s15
      %p12 = scmp.ge.s32.totalorder %s11, 6
      %s18 = sphi 0, %s37
      %s19 = sphi 0, %s33
      %s20 = sphi 0, %s29
      %s21 = sphi 0, %s18
      %s22 = sphi 0, %s19
      %s23 = sphi 0, %s20
      %s24 = sphi 0, %s21
      %s25 = sphi 0, %s22
      %s26 = sphi 0, %s23
      %s42 = sphi 0, %s44
      %s45 = sphi 0, %s42
      %s46 = sphi 0, %s45
      %s62 = sphi 0, %s46
      %s70 = sphi 0, %s72
      %s73 = sphi 0, %s70
      %s74 = sphi 0, %s73
      %s90 = sphi 0, %s74
      %s98 = sphi 0, %s100
      %s101 = sphi 0, %s98
      %s102 = sphi 0, %s101
      %s118 = sphi 0, %s102
    $region4: #{tpu_custom_call.1} parent=1 // loop_header_branch
      %14 = sbr.rel (%p12) target = $region8
    $region5: #{tpu_custom_call.1} parent=1 // loop_body
      %s16 = ssub.s32 %s11, 1
      %s17 = ssub.s32 %s11, 2
      %s27 = sadd.s32 1, %s20
      %p28 = scmp.ge.s32.totalorder %s27, 1
      %s29 = scalar_select %p28, 0, %s27
      %s30 = sadd.s32 1, %s19
      %s31 = scalar_select %p28, %s30, %s19
      %p32 = scmp.ge.s32.totalorder %s31, 1
      %s33 = scalar_select %p32, 0, %s31
      %s34 = sadd.s32 1, %s18
      %s35 = scalar_select %p32, %s34, %s18
      %p36 = scmp.ge.s32.totalorder %s35, 4
      %s37 = scalar_select %p36, 0, %s35
      %s38 = ssub.s32 %s18, %s37
      %s39 = ssub.s32 %s20, %s29
      %s40 = sor.u32 %s38, %s39
      %p41 = scmp.eq.s32.totalorder %s40, 0
      %s43 = sadd.s32 %s42, 1
      %s44 = scalar_select %p41, %s42, %s43
      %p47 = pneg %p41
      %p48 = scmp.eq.s32.totalorder %s11, 3
      %p49 = por %p47, %p48
      %p50 = scmp.ne.s32.totalorder %s42, %s45
      %p51 = scmp.eq.s32.totalorder %s11, 0
      %p52 = por %p50, %p51
      %p53 = scmp.ne.s32.totalorder %s42, %s45
      %p54 = scmp.eq.s32.totalorder %s16, 3
      %p55 = por %p53, %p54
      %p56 = scmp.ne.s32.totalorder %s45, %s46
      %p57 = scmp.eq.s32.totalorder %s16, 0
      %p58 = por %p56, %p57
      %p59 = scmp.ne.s32.totalorder %s45, %s46
      %p60 = scmp.eq.s32.totalorder %s17, 3
      %p61 = por %p59, %p60
      %p63 = scmp.ne.s32.totalorder %s46, %s62
      %p64 = scmp.eq.s32.totalorder %s17, 0
      %p65 = por %p63, %p64
      %s66 = ssub.s32 %s20, %s29
      %s67 = ssub.s32 %s19, %s33
      %s68 = sor.u32 %s66, %s67
      %p69 = scmp.eq.s32.totalorder %s68, 0
      %s71 = sadd.s32 %s70, 1
      %s72 = scalar_select %p69, %s70, %s71
      %p75 = pneg %p69
      %p76 = scmp.eq.s32.totalorder %s11, 3
      %p77 = por %p75, %p76
      %p78 = scmp.ne.s32.totalorder %s70, %s73
      %p79 = scmp.eq.s32.totalorder %s11, 0
      %p80 = por %p78, %p79
      %p81 = scmp.ne.s32.totalorder %s70, %s73
      %p82 = scmp.eq.s32.totalorder %s16, 3
      %p83 = por %p81, %p82
      %p84 = scmp.ne.s32.totalorder %s73, %s74
      %p85 = scmp.eq.s32.totalorder %s16, 0
      %p86 = por %p84, %p85
      %p87 = scmp.ne.s32.totalorder %s73, %s74
      %p88 = scmp.eq.s32.totalorder %s17, 3
      %p89 = por %p87, %p88
      %p91 = scmp.ne.s32.totalorder %s74, %s90
      %p92 = scmp.eq.s32.totalorder %s17, 0
      %p93 = por %p91, %p92
      %s94 = ssub.s32 %s18, %s37
      %s95 = ssub.s32 %s19, %s33
      %s96 = sor.u32 %s94, %s95
      %p97 = scmp.eq.s32.totalorder %s96, 0
      %s99 = sadd.s32 %s98, 1
      %s100 = scalar_select %p97, %s98, %s99
      %p103 = pneg %p97
      %p104 = scmp.eq.s32.totalorder %s11, 3
      %p105 = por %p103, %p104
      %p106 = scmp.ne.s32.totalorder %s98, %s101
      %p107 = scmp.eq.s32.totalorder %s11, 0
      %p108 = por %p106, %p107
      %p109 = scmp.ne.s32.totalorder %s98, %s101
      %p110 = scmp.eq.s32.totalorder %s16, 3
      %p111 = por %p109, %p110
      %p112 = scmp.ne.s32.totalorder %s101, %s102
      %p113 = scmp.eq.s32.totalorder %s16, 0
      %p114 = por %p112, %p113
      %p115 = scmp.ne.s32.totalorder %s101, %s102
      %p116 = scmp.eq.s32.totalorder %s17, 3
      %p117 = por %p115, %p116
      %p119 = scmp.ne.s32.totalorder %s102, %s118
      %p120 = scmp.eq.s32.totalorder %s17, 0
      %p121 = por %p119, %p120
      %p122 = scmp.le.s32.totalorder 1, %s11
      %p123 = scmp.lt.s32.totalorder %s11, 5
      %p124 = pnand %p122, %p123
      %p125 = pneg %p124
      // Predicated region
      $region9: #{tpu_custom_call.1} parent=5 // pred_check
        _
      $region10: #{tpu_custom_call.1} parent=5 // pred_check_branch
        %127 = sbr.rel (%p124) target = $region12
      $region11: #{tpu_custom_call.1} parent=5 // pred_region
        %s128 = ssub.s32 %s11, 1
        // Predicated region
        $region13: #{tpu_custom_call.1} parent=11 // pred_check
          %p129 = pneg %p86
        $region14: #{tpu_custom_call.1} parent=11 // pred_check_branch
          %131 = sbr.rel (%p129) target = $region16
        $region15: #{tpu_custom_call.1} parent=11 // pred_region
          %s132 = smul.u32 4, %s23
          %p133 = scmp.lt.s32.totalorder %s132, 3
          %s134 = scalar_select %p133, %s132, 3
          %p135 = scmp.lt.s32.totalorder %s22, 0
          %s136 = scalar_select %p135, %s22, 0
          %s137 = sadd.s32 %s136, %s134
          %s138 = smul.addr %s137, 4
          %s139 = scalar_lea.vmem %s1, %s138
          %s140 = smul.u32 4, %s23
        $region16: #{tpu_custom_call.1} parent=11 // pred_fallthru
          _
      $region12: #{tpu_custom_call.1} parent=5 // pred_fallthru
        _
      %p141 = scmp.lt.s32.totalorder %s11, 4
      // Predicated region
      $region17: #{tpu_custom_call.1} parent=5 // pred_check
        %p142 = pneg %p141
      $region18: #{tpu_custom_call.1} parent=5 // pred_check_branch
        %144 = sbr.rel (%p142) target = $region20
      $region19: #{tpu_custom_call.1} parent=5 // pred_region
        // Predicated region
        $region21: #{tpu_custom_call.1} parent=19 // pred_check
          %p145 = pneg %p52
        $region22: #{tpu_custom_call.1} parent=19 // pred_check_branch
          %147 = sbr.rel (%p145) target = $region24
        $region23: #{tpu_custom_call.1} parent=19 // pred_region
          %s148 = smul.u32 16, %s18
          %p149 = scmp.lt.s32.totalorder %s148, 63
          %s150 = scalar_select %p149, %s148, 63
          %p151 = scmp.lt.s32.totalorder %s20, 0
          %s152 = scalar_select %p151, %s20, 0
          %s153 = sadd.s32 %s152, %s150
          %s154 = smul.addr %s153, 4
          %s155 = scalar_lea.vmem %s0, %s154
          %s156 = smul.u32 16, %s18
        $region24: #{tpu_custom_call.1} parent=19 // pred_fallthru
          _
      $region20: #{tpu_custom_call.1} parent=5 // pred_fallthru
        _
      %p157 = scmp.le.s32.totalorder 1, %s11
      %p158 = scmp.lt.s32.totalorder %s11, 5
      %p159 = pnand %p157, %p158
      %p160 = pneg %p159
      // Predicated region
      $region25: #{tpu_custom_call.1} parent=5 // pred_check
        _
      $region26: #{tpu_custom_call.1} parent=5 // pred_check_branch
        %162 = sbr.rel (%p159) target = $region28
      $region27: #{tpu_custom_call.1} parent=5 // pred_region
        %s163 = ssub.s32 %s11, 1
        %s164 = smul.u32 16, %s21
        %p165 = scmp.lt.s32.totalorder %s164, 63
        %s166 = scalar_select %p165, %s164, 63
        %p167 = scmp.lt.s32.totalorder %s23, 0
        %s168 = scalar_select %p167, %s23, 0
        %s169 = sadd.s32 %s168, %s166
        %s170 = smul.addr %s169, 4
        %s171 = scalar_lea.vmem %s0, %s170
        %p172 = pneg %p58
        %p173 = pneg %p55
        %s174 = smul.u32 4, %s23
        %p175 = scmp.lt.s32.totalorder %s174, 3
        %s176 = scalar_select %p175, %s174, 3
        %p177 = scmp.lt.s32.totalorder %s22, 0
        %s178 = scalar_select %p177, %s22, 0
        %s179 = sadd.s32 %s178, %s176
        %s180 = smul.addr %s179, 4
        %s181 = scalar_lea.vmem %s1, %s180
        %p182 = pneg %p86
        %p183 = pneg %p83
        %p184 = pneg %p114
        %p185 = pneg %p111
        %s186 = sand.u32 %s101, 1
        %s187 = scalar_lea.sflag [#allocation4], %s186
        %s188 = sand.u32 %s101, 1
        %s189 = smul.addr %s188, 128
        %s190 = scalar_lea.vmem [#allocation3], %s189
        %s191 = smul.u32 16, %s21
        %p192 = scmp.lt.s32.totalorder %s191, 63
        %s193 = scalar_select %p192, %s191, 63
        %p194 = scmp.lt.s32.totalorder %s23, 0
        %s195 = scalar_select %p194, %s23, 0
        %s196 = sadd.s32 %s195, %s193
        %s197 = smul.addr %s196, 4
        %s198 = scalar_lea.vmem %s0, %s197
        %s199 = smul.u32 16, %s21
        %s200 = smul.u32 4, %s23
        %p201 = scmp.lt.s32.totalorder %s200, 3
        %s202 = scalar_select %p201, %s200, 3
        %p203 = scmp.lt.s32.totalorder %s22, 0
        %s204 = scalar_select %p203, %s22, 0
        %s205 = sadd.s32 %s204, %s202
        %s206 = smul.addr %s205, 4
        %s207 = scalar_lea.vmem %s1, %s206
        %s208 = smul.u32 4, %s23
        %s209 = smul.u32 16, %s21
        %p211 = scmp.eq.s32.totalorder %s23, 0
        // Predicated region
        $region29: #{tpu_custom_call.1} parent=27 // pred_check
          %p212 = pneg %p211
        $region30: #{tpu_custom_call.1} parent=27 // pred_check_branch
          %214 = sbr.rel (%p212) target = $region32
        $region31: #{tpu_custom_call.1} parent=27 // pred_region
          %215 = vst [vmem:[#allocation2] sm:$0xff] 0.0
          %216 = vst [vmem:[#allocation2 + $0x8] sm:$0xff] 0.0
          %217 = vst [vmem:[#allocation2 + $0x10] sm:$0xff] 0.0
          %218 = vst [vmem:[#allocation2 + $0x18] sm:$0xff] 0.0
          %219 = vst [vmem:[#allocation2 + $0x20] sm:$0xff] 0.0
          %220 = vst [vmem:[#allocation2 + $0x28] sm:$0xff] 0.0
          %221 = vst [vmem:[#allocation2 + $0x30] sm:$0xff] 0.0
          %222 = vst [vmem:[#allocation2 + $0x38] sm:$0xff] 0.0
          %223 = vst [vmem:[#allocation2 + $0x40] sm:$0xff] 0.0
          %224 = vst [vmem:[#allocation2 + $0x48] sm:$0xff] 0.0
          %225 = vst [vmem:[#allocation2 + $0x50] sm:$0xff] 0.0
          %226 = vst [vmem:[#allocation2 + $0x58] sm:$0xff] 0.0
          %227 = vst [vmem:[#allocation2 + $0x60] sm:$0xff] 0.0
          %228 = vst [vmem:[#allocation2 + $0x68] sm:$0xff] 0.0
          %229 = vst [vmem:[#allocation2 + $0x70] sm:$0xff] 0.0
          %230 = vst [vmem:[#allocation2 + $0x78] sm:$0xff] 0.0
        $region32: #{tpu_custom_call.1} parent=27 // pred_fallthru
          _
        %v231 = vld [vmem:[#allocation2] sm:$0xff]
        %v232 = vld [vmem:[#allocation2 + $0x8] sm:$0xff]
        %v233 = vld [vmem:[#allocation2 + $0x10] sm:$0xff]
        %v234 = vld [vmem:[#allocation2 + $0x18] sm:$0xff]
        %v235 = vld [vmem:[#allocation2 + $0x20] sm:$0xff]
        %v236 = vld [vmem:[#allocation2 + $0x28] sm:$0xff]
        %v237 = vld [vmem:[#allocation2 + $0x30] sm:$0xff]
        %v238 = vld [vmem:[#allocation2 + $0x38] sm:$0xff]
        %v239 = vld [vmem:[#allocation2 + $0x40] sm:$0xff]
        %v240 = vld [vmem:[#allocation2 + $0x48] sm:$0xff]
        %v241 = vld [vmem:[#allocation2 + $0x50] sm:$0xff]
        %v242 = vld [vmem:[#allocation2 + $0x58] sm:$0xff]
        %v243 = vld [vmem:[#allocation2 + $0x60] sm:$0xff]
        %v244 = vld [vmem:[#allocation2 + $0x68] sm:$0xff]
        %v245 = vld [vmem:[#allocation2 + $0x70] sm:$0xff]
        %v246 = vld [vmem:[#allocation2 + $0x78] sm:$0xff]
        %v247 = vld [vmem:[%s198] sm:$0xf]
        %v248 = vld [vmem:[%s198 + $0x4] sm:$0xf]
        %v249 = vld [vmem:[%s198 + $0x8] sm:$0xf]
        %v250 = vld [vmem:[%s198 + $0xc] sm:$0xf]
        %v251 = vld [vmem:[%s198 + $0x10] sm:$0xf]
        %v252 = vld [vmem:[%s198 + $0x14] sm:$0xf]
        %v253 = vld [vmem:[%s198 + $0x18] sm:$0xf]
        %v254 = vld [vmem:[%s198 + $0x1c] sm:$0xf]
        %v255 = vld [vmem:[%s198 + $0x20] sm:$0xf]
        %v256 = vld [vmem:[%s198 + $0x24] sm:$0xf]
        %v257 = vld [vmem:[%s198 + $0x28] sm:$0xf]
        %v258 = vld [vmem:[%s198 + $0x2c] sm:$0xf]
        %v259 = vld [vmem:[%s198 + $0x30] sm:$0xf]
        %v260 = vld [vmem:[%s198 + $0x34] sm:$0xf]
        %v261 = vld [vmem:[%s198 + $0x38] sm:$0xf]
        %v262 = vld [vmem:[%s198 + $0x3c] sm:$0xf]
        %v263 = vld [vmem:[%s207] sm:$0xf]
        %v264 = vld [vmem:[%s207 + $0x4] sm:$0xf]
        %v265 = vld [vmem:[%s207 + $0x8] sm:$0xf]
        %v266 = vld [vmem:[%s207 + $0xc] sm:$0x3]
        %v283 = vunpack.c.l.b16 %v247
        %v284 = vunpack.c.l.b16 %v248
        %v285 = vunpack.c.l.b16 %v249
        %v286 = vunpack.c.l.b16 %v250
        %v287 = vunpack.c.l.b16 %v251
        %v288 = vunpack.c.l.b16 %v252
        %v289 = vunpack.c.l.b16 %v253
        %v290 = vunpack.c.l.b16 %v254
        %v291 = vunpack.c.l.b16 %v255
        %v292 = vunpack.c.l.b16 %v256
        %v293 = vunpack.c.l.b16 %v257
        %v294 = vunpack.c.l.b16 %v258
        %v295 = vunpack.c.l.b16 %v259
        %v296 = vunpack.c.l.b16 %v260
        %v297 = vunpack.c.l.b16 %v261
        %v298 = vunpack.c.l.b16 %v262
        %v299 = vpack.c.b16 %v284, %v283
        %v300 = vpack.c.b16 %v286, %v285
        %v301 = vpack.c.b16 %v288, %v287
        %v302 = vpack.c.b16 %v290, %v289
        %v303 = vpack.c.b16 %v292, %v291
        %v304 = vpack.c.b16 %v294, %v293
        %v305 = vpack.c.b16 %v296, %v295
        %v306 = vpack.c.b16 %v298, %v297
        %v311 = vunpack.c.l.b16 %v263
        %v312 = vunpack.c.l.b16 %v264
        %v313 = vunpack.c.l.b16 %v265
        %v314 = vunpack.c.l.b16 %v266
        %v315 = vpack.c.b16 %v312, %v311
        %v316 = vpack.c.b16 %v314, %v313
        %vm318 = vcmask 220160
        %v320 = vsel %vm318, %v299, 0
        %v323 = vsel %vm318, %v300, 0
        %v326 = vsel %vm318, %v301, 0
        %v329 = vsel %vm318, %v302, 0
        %v332 = vsel %vm318, %v303, 0
        %v335 = vsel %vm318, %v304, 0
        %v338 = vsel %vm318, %v305, 0
        %v341 = vsel %vm318, %v306, 0
        %vm343 = vcmask 1044480
        %vm344 = vcmask 1045504
        %v345 = vsel %vm343, 4294967295, 65535
        %v346 = vsel %vm344, %v345, 0
        %v348 = vand.u32 %v316, %v346
        %350 = vmatprep.subr.bf16.mxu0 0
        %351 = vmatpush1.bf16.msra.mxu0 0
        %352 = vmatprep.subr.bf16.mxu0 0
        %353 = vmatpush1.bf16.msra.mxu0 0
        %354 = vmatprep.subr.bf16.mxu0 0
        %355 = vmatpush1.bf16.msra.mxu0 0
        %356 = vmatprep.subr.bf16.mxu0 0
        %357 = vmatpush1.bf16.msra.mxu0 0
        %358 = vmatprep.subr.bf16.mxu0 0
        %359 = vmatpush1.bf16.msra.mxu0 0
        %360 = vmatprep.subr.bf16.mxu0 0
        %361 = vmatpush1.bf16.msra.mxu0 0
        %362 = vmatprep.subr.bf16.mxu0 0
        %363 = vmatpush1.bf16.msra.mxu0 %v348
        %364 = vmatprep.subr.bf16.mxu0 0
        %365 = vmatpush1.bf16.msra.mxu0 %v315
        %366 = vmatprep.subr.bf16.mxu0 0
        %367 = vmatpush2.bf16.msra.mxu0 0
        %368 = vmatprep.subr.bf16.mxu0 0
        %369 = vmatpush2.bf16.msra.mxu0 0
        %370 = vmatprep.subr.bf16.mxu0 0
        %371 = vmatpush2.bf16.msra.mxu0 0
        %372 = vmatprep.subr.bf16.mxu0 0
        %373 = vmatpush2.bf16.msra.mxu0 0
        %374 = vmatprep.subr.bf16.mxu0 0
        %375 = vmatpush2.bf16.msra.mxu0 0
        %376 = vmatprep.subr.bf16.mxu0 0
        %377 = vmatpush2.bf16.msra.mxu0 0
        %378 = vmatprep.subr.bf16.mxu0 0
        %379 = vmatpush2.bf16.msra.mxu0 0
        %380 = vmatprep.subr.bf16.mxu0 0
        %381 = vmatpush2.bf16.msra.mxu0 0
        %382 = vmatprep.mubr.bf16.mxu0 0
        %383 = vmatmul.mubr.bf16.gmra.mxu0 %v320
        %v384 = vpop.f32.mrf.mxu0
        %v385 = vadd.f32 0.0, %v384
        %v386 = vpop.f32.mrf.mxu0
        %v387 = vpop.f32.mrf.mxu0
        %v388 = vadd.f32 0.0, %v387
        %v389 = vpop.f32.mrf.mxu0
        %390 = vmatprep.mubr.bf16.mxu0 0
        %391 = vmatmul.mubr.bf16.gmra.mxu0 %v323
        %v392 = vpop.f32.mrf.mxu0
        %v393 = vadd.f32 0.0, %v392
        %v394 = vpop.f32.mrf.mxu0
        %v395 = vpop.f32.mrf.mxu0
        %v396 = vadd.f32 0.0, %v395
        %v397 = vpop.f32.mrf.mxu0
        %398 = vmatprep.mubr.bf16.mxu0 0
        %399 = vmatmul.mubr.bf16.gmra.mxu0 %v326
        %v400 = vpop.f32.mrf.mxu0
        %v401 = vadd.f32 0.0, %v400
        %v402 = vpop.f32.mrf.mxu0
        %v403 = vpop.f32.mrf.mxu0
        %v404 = vadd.f32 0.0, %v403
        %v405 = vpop.f32.mrf.mxu0
        %406 = vmatprep.mubr.bf16.mxu0 0
        %407 = vmatmul.mubr.bf16.gmra.mxu0 %v329
        %v408 = vpop.f32.mrf.mxu0
        %v409 = vadd.f32 0.0, %v408
        %v410 = vpop.f32.mrf.mxu0
        %v411 = vpop.f32.mrf.mxu0
        %v412 = vadd.f32 0.0, %v411
        %v413 = vpop.f32.mrf.mxu0
        %414 = vmatprep.mubr.bf16.mxu0 0
        %415 = vmatmul.mubr.bf16.gmra.mxu0 %v332
        %v416 = vpop.f32.mrf.mxu0
        %v417 = vadd.f32 0.0, %v416
        %v418 = vpop.f32.mrf.mxu0
        %v419 = vpop.f32.mrf.mxu0
        %v420 = vadd.f32 0.0, %v419
        %v421 = vpop.f32.mrf.mxu0
        %422 = vmatprep.mubr.bf16.mxu0 0
        %423 = vmatmul.mubr.bf16.gmra.mxu0 %v335
        %v424 = vpop.f32.mrf.mxu0
        %v425 = vadd.f32 0.0, %v424
        %v426 = vpop.f32.mrf.mxu0
        %v427 = vpop.f32.mrf.mxu0
        %v428 = vadd.f32 0.0, %v427
        %v429 = vpop.f32.mrf.mxu0
        %430 = vmatprep.mubr.bf16.mxu0 0
        %431 = vmatmul.mubr.bf16.gmra.mxu0 %v338
        %v432 = vpop.f32.mrf.mxu0
        %v433 = vadd.f32 0.0, %v432
        %v434 = vpop.f32.mrf.mxu0
        %v435 = vpop.f32.mrf.mxu0
        %v436 = vadd.f32 0.0, %v435
        %v437 = vpop.f32.mrf.mxu0
        %438 = vmatprep.mubr.bf16.mxu0 0
        %439 = vmatmul.mubr.bf16.gmra.mxu0 %v341
        %v440 = vpop.f32.mrf.mxu0
        %v441 = vadd.f32 0.0, %v440
        %v442 = vpop.f32.mrf.mxu0
        %v443 = vpop.f32.mrf.mxu0
        %v444 = vadd.f32 0.0, %v443
        %v445 = vpop.f32.mrf.mxu0
        %446 = vdwg.mxu0
        %v447 = vadd.f32 %v231, %v385
        %v448 = vadd.f32 %v232, %v388
        %v449 = vadd.f32 %v233, %v393
        %v450 = vadd.f32 %v234, %v396
        %v451 = vadd.f32 %v235, %v401
        %v452 = vadd.f32 %v236, %v404
        %v453 = vadd.f32 %v237, %v409
        %v454 = vadd.f32 %v238, %v412
        %v455 = vadd.f32 %v239, %v417
        %v456 = vadd.f32 %v240, %v420
        %v457 = vadd.f32 %v241, %v425
        %v458 = vadd.f32 %v242, %v428
        %v459 = vadd.f32 %v243, %v433
        %v460 = vadd.f32 %v244, %v436
        %v461 = vadd.f32 %v245, %v441
        %v462 = vadd.f32 %v246, %v444
        %463 = vst [vmem:[#allocation2] sm:$0xff] %v447
        %464 = vst [vmem:[#allocation2 + $0x8] sm:$0xff] %v448
        %465 = vst [vmem:[#allocation2 + $0x10] sm:$0xff] %v449
        %466 = vst [vmem:[#allocation2 + $0x18] sm:$0xff] %v450
        %467 = vst [vmem:[#allocation2 + $0x20] sm:$0xff] %v451
        %468 = vst [vmem:[#allocation2 + $0x28] sm:$0xff] %v452
        %469 = vst [vmem:[#allocation2 + $0x30] sm:$0xff] %v453
        %470 = vst [vmem:[#allocation2 + $0x38] sm:$0xff] %v454
        %471 = vst [vmem:[#allocation2 + $0x40] sm:$0xff] %v455
        %472 = vst [vmem:[#allocation2 + $0x48] sm:$0xff] %v456
        %473 = vst [vmem:[#allocation2 + $0x50] sm:$0xff] %v457
        %474 = vst [vmem:[#allocation2 + $0x58] sm:$0xff] %v458
        %475 = vst [vmem:[#allocation2 + $0x60] sm:$0xff] %v459
        %476 = vst [vmem:[#allocation2 + $0x68] sm:$0xff] %v460
        %477 = vst [vmem:[#allocation2 + $0x70] sm:$0xff] %v461
        %478 = vst [vmem:[#allocation2 + $0x78] sm:$0xff] %v462
        // Predicated region
        $region33: #{tpu_custom_call.1} parent=27 // pred_check
          %p479 = pneg %p211
        $region34: #{tpu_custom_call.1} parent=27 // pred_check_branch
          %481 = sbr.rel (%p479) target = $region36
        $region35: #{tpu_custom_call.1} parent=27 // pred_region
          %v482 = vld [vmem:[#allocation2] sm:$0xff]
          %v483 = vld [vmem:[#allocation2 + $0x8] sm:$0xff]
          %v484 = vld [vmem:[#allocation2 + $0x10] sm:$0xff]
          %v485 = vld [vmem:[#allocation2 + $0x18] sm:$0xff]
          %v486 = vld [vmem:[#allocation2 + $0x20] sm:$0xff]
          %v487 = vld [vmem:[#allocation2 + $0x28] sm:$0xff]
          %v488 = vld [vmem:[#allocation2 + $0x30] sm:$0xff]
          %v489 = vld [vmem:[#allocation2 + $0x38] sm:$0xff]
          %v490 = vld [vmem:[#allocation2 + $0x40] sm:$0xff]
          %v491 = vld [vmem:[#allocation2 + $0x48] sm:$0xff]
          %v492 = vld [vmem:[#allocation2 + $0x50] sm:$0xff]
          %v493 = vld [vmem:[#allocation2 + $0x58] sm:$0xff]
          %v494 = vld [vmem:[#allocation2 + $0x60] sm:$0xff]
          %v495 = vld [vmem:[#allocation2 + $0x68] sm:$0xff]
          %v496 = vld [vmem:[#allocation2 + $0x70] sm:$0xff]
          %v497 = vld [vmem:[#allocation2 + $0x78] sm:$0xff]
          %498 = vst [vmem:[%s190] sm:$0xff] %v482
          %499 = vst [vmem:[%s190 + $0x8] sm:$0xff] %v483
          %500 = vst [vmem:[%s190 + $0x10] sm:$0xff] %v484
          %501 = vst [vmem:[%s190 + $0x18] sm:$0xff] %v485
          %502 = vst [vmem:[%s190 + $0x20] sm:$0xff] %v486
          %503 = vst [vmem:[%s190 + $0x28] sm:$0xff] %v487
          %504 = vst [vmem:[%s190 + $0x30] sm:$0xff] %v488
          %505 = vst [vmem:[%s190 + $0x38] sm:$0xff] %v489
          %506 = vst [vmem:[%s190 + $0x40] sm:$0xff] %v490
          %507 = vst [vmem:[%s190 + $0x48] sm:$0xff] %v491
          %508 = vst [vmem:[%s190 + $0x50] sm:$0xff] %v492
          %509 = vst [vmem:[%s190 + $0x58] sm:$0xff] %v493
          %510 = vst [vmem:[%s190 + $0x60] sm:$0xff] %v494
          %511 = vst [vmem:[%s190 + $0x68] sm:$0xff] %v495
          %512 = vst [vmem:[%s190 + $0x70] sm:$0xff] %v496
          %513 = vst [vmem:[%s190 + $0x78] sm:$0xff] %v497
        $region36: #{tpu_custom_call.1} parent=27 // pred_fallthru
          _
        %s514 = sand.u32 %s101, 1
        %s515 = scalar_lea.sflag [#allocation4], %s514
        %s516 = sand.u32 %s101, 1
        %s517 = smul.addr %s516, 128
        %s518 = scalar_lea.vmem [#allocation3], %s517
        // Predicated region
        $region37: #{tpu_custom_call.1} parent=27 // pred_check
          %p519 = pneg %p111
        $region38: #{tpu_custom_call.1} parent=27 // pred_check_branch
          %521 = sbr.rel (%p519) target = $region40
        $region39: #{tpu_custom_call.1} parent=27 // pred_region
          %s522 = smul.u32 16, %s21
          %s524 = ssub.s32 2048, 2048
          %525 = vsyncadd %s515, %s524
          %s526 = sadd.s32 %s22, %s522
          %s527 = smul.addr %s526, 128
          %s528 = scalar_lea.hbm %s2, %s527
          %s529 = sshll.u32 %s518, 4
          %s530 = int_to_ptr.vmem [resolvable:$true] %s529
          %535 = dma.vmem_to_hbm [thread:$0]  %s530, 2048, %s528, %s515, 128, 128, 8
        $region40: #{tpu_custom_call.1} parent=27 // pred_fallthru
          _
      $region28: #{tpu_custom_call.1} parent=5 // pred_fallthru
        _
      %p536 = scmp.le.s32.totalorder 2, %s11
      // Predicated region
      $region41: #{tpu_custom_call.1} parent=5 // pred_check
        %p537 = pneg %p536
      $region42: #{tpu_custom_call.1} parent=5 // pred_check_branch
        %539 = sbr.rel (%p537) target = $region44
      $region43: #{tpu_custom_call.1} parent=5 // pred_region
        %s540 = ssub.s32 %s11, 2
        // Predicated region
        $region45: #{tpu_custom_call.1} parent=43 // pred_check
          %p541 = pneg %p117
        $region46: #{tpu_custom_call.1} parent=43 // pred_check_branch
          %543 = sbr.rel (%p541) target = $region48
        $region47: #{tpu_custom_call.1} parent=43 // pred_region
          %s544 = sand.u32 %s102, 1
          %s545 = scalar_lea.sflag [#allocation4], %s544
          %s546 = sand.u32 %s102, 1
          %s547 = smul.addr %s546, 128
          %s548 = scalar_lea.vmem [#allocation3], %s547
          %549 = dma.done %s545, 2048
        $region48: #{tpu_custom_call.1} parent=43 // pred_fallthru
          _
      $region44: #{tpu_custom_call.1} parent=5 // pred_fallthru
        _
    $region6: #{tpu_custom_call.1} parent=1 // loop_footer
      %s15 = sadd.s32 1, %s11
    $region7: #{tpu_custom_call.1} parent=1 // loop_footer_branch
      %10 = sbr.rel target = $region3
    $region8: #{tpu_custom_call.1} parent=1 // loop_exit
      _
    %550 = vsyncpa [#allocation4], 1
    %s551 = scalar_lea.sflag [#allocation4], 1
    %552 = vsyncpa %s551, 1

</llo_original>
